<compile_context>
chip_gen: v7x
topology: tpu7x:2x2x1
jax: 0.10.0
libtpu: 0.0.40
codegen_flags: <defaults>
</compile_context>

<pallas_src>
import functools

import jax
import jax.numpy as jnp
from jax import lax
from jax.experimental import pallas as pl
from jax.experimental.pallas import tpu as pltpu

LANE = 128


# ----------------------------------------------------------------------------
# Pallas kernel: fused (patches @ W_scaled) + bias, then SiLU
# ----------------------------------------------------------------------------
def conv_bn_silu_kernel(p_ref, w_ref, bias_ref, o_ref):
    # p_ref:    (TM, Kd)        bf16 im2col patches tile
    # w_ref:    (Kd, Cout_pad)  bf16 conv weight with BN scale pre-folded
    # bias_ref: (1, Cout_pad)   f32 folded BN bias = beta - mean * scale
    # o_ref:    (TM, Cout_pad)  f32, lane-dense (Cout_pad % 128 == 0)
    acc = jnp.dot(p_ref[...], w_ref[...], preferred_element_type=jnp.float32)
    y = acc + bias_ref[...]
    # SiLU: y * sigmoid(y).  exp and the approximate reciprocal both go
    # through the EUP slot, keeping the epilogue off the VALU critical path.
    o_ref[...] = (y * pl.reciprocal(1.0 + jnp.exp(-y), approx=True)).astype(o_ref.dtype)


# ----------------------------------------------------------------------------
# Glue: im2col in NHWC (lane-contiguous channel slices).
# Patch column ordering is (kh major, kw, c_in minor); the weight is
# rearranged to match.
# ----------------------------------------------------------------------------
def im2col_nhwc(x_nhwc, ksize, padding, stride):
    n, h, w, c = x_nhwc.shape
    xp = jnp.pad(x_nhwc, ((0, 0), (padding, padding), (padding, padding), (0, 0)))
    ho = (h + 2 * padding - ksize) // stride + 1
    wo = (w + 2 * padding - ksize) // stride + 1
    cols = []
    for kh in range(ksize):
        for kw in range(ksize):
            cols.append(
                xp[:, kh: kh + stride * ho: stride, kw: kw + stride * wo: stride, :]
            )  # (N, Ho, Wo, C)
    col = jnp.concatenate(cols, axis=-1)                 # (N, Ho, Wo, K*K*C)
    return col.reshape(n * ho * wo, ksize * ksize * c), ho, wo


def _choose_tm(m, tm_req):
    # Row tile: multiple of 128, large enough to amortize the ~0.35us per-step
    # overhead, but keep >= 2 grid steps when the problem allows it so both
    # v7x TensorCores get work under dimension_semantics=("parallel",).
    tm = max(LANE, min(int(tm_req), 1024))
    tm = (tm // LANE) * LANE
    while tm > LANE and pl.cdiv(m, tm) < 2:
        tm = max(LANE, (tm // 2 // LANE) * LANE)
    return tm


# ----------------------------------------------------------------------------
# Wrapper: convbnsilu_block forward (inference-mode BN)
# ----------------------------------------------------------------------------
@functools.partial(
    jax.jit,
    static_argnames=("ksize", "padding", "stride", "tm", "nchw_output"))
def convbnsilu_forward(x, weight, gamma, beta, run_mean, run_var,
                       *, ksize, padding, stride, eps=1e-5, tm=512,
                       nchw_output=True):
    n, c_in, h, w = x.shape
    c_out = weight.shape[0]
    kd = c_in * ksize * ksize

    # NHWC so channels land on the 128-lane axis for the im2col slices.
    x_nhwc = jnp.transpose(x, (0, 2, 3, 1))
    patches, ho, wo = im2col_nhwc(x_nhwc, ksize, padding, stride)   # (M, Kd)
    m = patches.shape[0]

    tm = _choose_tm(m, tm)
    m_pad = pl.cdiv(m, tm) * tm
    if m_pad != m:
        patches = jnp.pad(patches, ((0, m_pad - m), (0, 0)))
    patches = patches.astype(jnp.bfloat16)    # bf16 MXU input, half DMA bytes

    # Weight (C_out, C_in, K, K) -> (K, K, C_in, C_out) -> (Kd, C_out);
    # matches the (kh, kw, c_in) patch-column ordering above.
    w_mat = jnp.transpose(weight, (2, 3, 1, 0)).reshape(kd, c_out)

    # Fold inference BN: scale into the weight columns, bias kept separate.
    inv_std = 1.0 / jnp.sqrt(run_var + eps)
    scale = gamma * inv_std                   # (C_out,)
    bias = beta - run_mean * scale            # (C_out,)
    w_mat = w_mat * scale[None, :]

    # Lane-dense output: pad C_out to a multiple of 128 so output stores are
    # full-lane vst instead of masked partial stores; pad sliced off below.
    c_out_pad = pl.cdiv(c_out, LANE) * LANE
    if c_out_pad != c_out:
        w_mat = jnp.pad(w_mat, ((0, 0), (0, c_out_pad - c_out)))
        bias = jnp.pad(bias, (0, c_out_pad - c_out))
    w_mat = w_mat.astype(jnp.bfloat16)
    bias = bias.reshape(1, c_out_pad).astype(jnp.float32)

    # Explicit VMEM budget: pipeline double-buffers each operand; add headroom
    # and cap at 48 MiB so the same choice is safe on v7x (64 MiB physical).
    bytes_per_step = (2 * tm * kd * 2            # patches tile (bf16) x2
                      + 2 * kd * c_out_pad * 2   # weight (bf16) x2
                      + 2 * c_out_pad * 4        # bias (f32) x2
                      + 2 * tm * c_out_pad * 4)  # output tile (f32) x2
    vmem_limit = int(min(max(4 * bytes_per_step, 8 << 20), 48 << 20))

    out_flat = pl.pallas_call(
        conv_bn_silu_kernel,
        out_shape=jax.ShapeDtypeStruct((m_pad, c_out_pad), jnp.float32),
        grid=(m_pad // tm,),
        in_specs=[
            pl.BlockSpec((tm, kd), lambda i: (i, 0)),
            pl.BlockSpec((kd, c_out_pad), lambda i: (0, 0)),
            pl.BlockSpec((1, c_out_pad), lambda i: (0, 0)),
        ],
        out_specs=pl.BlockSpec((tm, c_out_pad), lambda i: (i, 0)),
        compiler_params=pltpu.CompilerParams(
            dimension_semantics=("parallel",),
            vmem_limit_bytes=vmem_limit),
    )(patches, w_mat, bias)

    out = out_flat[:m, :c_out].reshape(n, ho, wo, c_out)   # NHWC
    if nchw_output:
        # PyTorch-layout parity; consumers that accept NHWC can skip this
        # full-output transpose by passing nchw_output=False.
        out = jnp.transpose(out, (0, 3, 1, 2))
    return out


# ----------------------------------------------------------------------------
# Pure-JAX reference (lax.conv, f32) for verification
# ----------------------------------------------------------------------------
def reference_forward(x, weight, gamma, beta, run_mean, run_var,
                      *, ksize, padding, stride, eps=1e-5):
    conv = lax.conv_general_dilated(
        x, weight,
        window_strides=(stride, stride),
        padding=[(padding, padding), (padding, padding)],
        dimension_numbers=("NCHW", "OIHW", "NCHW"),
    )
    scale = (gamma / jnp.sqrt(run_var + eps)).reshape(1, -1, 1, 1)
    bias = (beta - run_mean * gamma / jnp.sqrt(run_var + eps)).reshape(1, -1, 1, 1)
    y = conv * scale + bias
    return y * jax.nn.sigmoid(y)


if __name__ == "__main__":
    # convbnsilu_block(in_planes=4, out_planes=8, kernel_size=3, padding=1,
    #                  stride=1, usebn=True)
    in_planes, out_planes = 4, 8
    ksize, padding, stride = 3, 1, 1
    n, h, w = 2, 16, 16

    key = jax.random.PRNGKey(0)
    kx, kw_, kg, kb, km, kv = jax.random.split(key, 6)

    x = jax.random.normal(kx, (n, in_planes, h, w), dtype=jnp.float32)
    # Conv2d weight (no bias since usebn=True): (C_out, C_in, K, K)
    fan_in = in_planes * ksize * ksize
    bound = 1.0 / (fan_in ** 0.5)
    weight = jax.random.uniform(kw_, (out_planes, in_planes, ksize, ksize),
                                minval=-bound, maxval=bound, dtype=jnp.float32)
    # BatchNorm2d parameters / running stats (deterministic, non-trivial).
    gamma = 1.0 + 0.1 * jax.random.normal(kg, (out_planes,), dtype=jnp.float32)
    beta = 0.1 * jax.random.normal(kb, (out_planes,), dtype=jnp.float32)
    run_mean = 0.1 * jax.random.normal(km, (out_planes,), dtype=jnp.float32)
    run_var = jnp.abs(jax.random.normal(kv, (out_planes,), dtype=jnp.float32)) + 0.5

    out = convbnsilu_forward(x, weight, gamma, beta, run_mean, run_var,
                             ksize=ksize, padding=padding, stride=stride)
    out = jax.block_until_ready(out)

    ref = reference_forward(x, weight, gamma, beta, run_mean, run_var,
                            ksize=ksize, padding=padding, stride=stride)
    assert out.shape == (n, out_planes, h, w), out.shape
    max_err = float(jnp.max(jnp.abs(out - ref)))
    # bf16 MXU inputs + approx-reciprocal sigmoid -> looser tolerance than f32.
    assert max_err < 3e-2, max_err

    print("KERNEL_OK")
</pallas_src>

<mosaic_0001>
module attributes {stable_mosaic.version = 11 : i64} {
  func.func @conv_bn_silu_kernel(%arg0: i32, %arg1: memref<256x36xbf16, #tpu.memory_space<vmem>>, %arg2: memref<36x128xbf16, #tpu.memory_space<vmem>>, %arg3: memref<1x128xf32, #tpu.memory_space<vmem>>, %arg4: memref<256x128xf32, #tpu.memory_space<vmem>>) attributes {dimension_semantics = [#tpu.dimension_semantics<parallel>], iteration_bounds = array<i64: 2>, scalar_prefetch = 0 : i64, scratch_operands = 0 : i64, tpu.core_type = #tpu.core_type<tc>, window_params = [{transform_indices = @transform_0, window_bounds = array<i64: 256, 36>}, {pipeline_mode = #tpu.pipeline_mode<synchronous>, transform_indices = @transform_1, window_bounds = array<i64: 36, 128>}, {pipeline_mode = #tpu.pipeline_mode<synchronous>, transform_indices = @transform_2, window_bounds = array<i64: 1, 128>}, {transform_indices = @transform_3, window_bounds = array<i64: 256, 128>}]} {
    %c0 = arith.constant 0 : index
    %c0_0 = arith.constant 0 : index
    %0 = vector.load %arg1[%c0, %c0_0] : memref<256x36xbf16, #tpu.memory_space<vmem>>, vector<256x36xbf16>
    %c0_1 = arith.constant 0 : index
    %c0_2 = arith.constant 0 : index
    %1 = vector.load %arg2[%c0_1, %c0_2] : memref<36x128xbf16, #tpu.memory_space<vmem>>, vector<36x128xbf16>
    %cst = arith.constant dense<0.000000e+00> : vector<256x128xf32>
    %2 = tpu.matmul %0, %1, %cst {dimension_numbers = #tpu.dot_dimension_numbers<[1], [0], [0], [1], [0, 0, 1, 1], [], []>} : vector<256x36xbf16>, vector<36x128xbf16>, vector<256x128xf32> -> vector<256x128xf32>
    %c0_3 = arith.constant 0 : index
    %c0_4 = arith.constant 0 : index
    %3 = vector.load %arg3[%c0_3, %c0_4] : memref<1x128xf32, #tpu.memory_space<vmem>>, vector<1x128xf32>
    %4 = vector.broadcast %3 : vector<1x128xf32> to vector<256x128xf32>
    %5 = arith.addf %2, %4 : vector<256x128xf32>
    %cst_5 = arith.constant 0.000000e+00 : f32
    %6 = vector.broadcast %cst_5 : f32 to vector<256x128xf32>
    %7 = arith.subf %6, %5 : vector<256x128xf32>
    %8 = math.exp %7 : vector<256x128xf32>
    %cst_6 = arith.constant 1.000000e+00 : f32
    %9 = vector.broadcast %cst_6 : f32 to vector<256x128xf32>
    %10 = arith.addf %9, %8 : vector<256x128xf32>
    %11 = tpu.reciprocal %10 {approx = true} : vector<256x128xf32> -> vector<256x128xf32>
    %12 = arith.mulf %5, %11 : vector<256x128xf32>
    %c0_7 = arith.constant 0 : index
    %c0_8 = arith.constant 0 : index
    %13 = vector.load %arg4[%c0_7, %c0_8] : memref<256x128xf32, #tpu.memory_space<vmem>>, vector<256x128xf32>
    tpu.vector_store %arg4[%c0_7, %c0_8], %12 {strides = array<i32>} : memref<256x128xf32, #tpu.memory_space<vmem>>, vector<256x128xf32>,
    return
  }
  func.func @transform_0(%arg0: i32) -> (i32, i32) {
    %c0_i32 = arith.constant 0 : i32
    %c0_i32_0 = arith.constant 0 : i32
    return %arg0, %c0_i32 : i32, i32
  }
  func.func @transform_1(%arg0: i32) -> (i32, i32) {
    %c0_i32 = arith.constant 0 : i32
    %c0_i32_0 = arith.constant 0 : i32
    %c0_i32_1 = arith.constant 0 : i32
    return %c0_i32, %c0_i32_0 : i32, i32
  }
  func.func @transform_2(%arg0: i32) -> (i32, i32) {
    %c0_i32 = arith.constant 0 : i32
    %c0_i32_0 = arith.constant 0 : i32
    %c0_i32_1 = arith.constant 0 : i32
    return %c0_i32, %c0_i32_0 : i32, i32
  }
  func.func @transform_3(%arg0: i32) -> (i32, i32) {
    %c0_i32 = arith.constant 0 : i32
    %c0_i32_0 = arith.constant 0 : i32
    return %arg0, %c0_i32 : i32, i32
  }
}

</mosaic_0001>

<llo_original>
// kernel: convbnsilu_forward.1
$region0: #{convbnsilu_forward.1}
  #allocation0 [shape = 'u32[]', space=smem, size = 0x4, offset = 0x4, fixed_abs, tag = 'smem constant byte address 0x4 - core index']
  #allocation1 [shape = 'u32[144,128]{1,0:T(1,128)}', space=vmem, size = 0x12000, scoped, tag = 'internal scratch']
  %s0 = inlined_call_operand.vmem [shape: bf16[512,36], index: 0, kind: input, shape index: {}]
  %s1 = inlined_call_operand.vmem [shape: bf16[36,128], index: 1, kind: input, shape index: {}]
  %s2 = inlined_call_operand.vmem [shape: f32[1,128], index: 2, kind: input, shape index: {}]
  %s3 = inlined_call_operand.vmem [shape: f32[512,128], index: 3, kind: output, shape index: {}]
  %s4 = sld [smem:[#allocation0]]
  $region45: #{convbnsilu_forward.1} parent=0
    _
  %s6 = ssub.s32 1, %s4
  %s7 = scalar_select 0, %s6, %s4
  loop: start=0, step=1, limit=4
  $region2: #{convbnsilu_forward.1} parent=0 // loop_pre_header
    _
  $region3: #{convbnsilu_forward.1} parent=0 // loop_header
    %s9 = sphi 0, %s13
    %p10 = scmp.ge.s32.totalorder %s9, 4
    %s19 = sphi 0, %s21
    %s22 = sphi 0, %s19
    %s23 = sphi 0, %s22
    %s39 = sphi 0, %s23
    %s43 = sphi 0, %s43
    %s45 = sphi 0, %s43
    %s46 = sphi 0, %s45
    %s60 = sphi 0, %s46
    %s64 = sphi 0, %s64
    %s66 = sphi 0, %s64
    %s67 = sphi 0, %s66
    %s81 = sphi 0, %s67
    %s87 = sphi 0, %s89
    %s90 = sphi 0, %s87
    %s91 = sphi 0, %s90
    %s107 = sphi 0, %s91
  $region4: #{convbnsilu_forward.1} parent=0 // loop_header_branch
    %12 = sbr.rel (%p10) target = $region8
  $region5: #{convbnsilu_forward.1} parent=0 // loop_body
    %s14 = ssub.s32 %s9, 1
    %s15 = ssub.s32 %s9, 2
    %s16 = sadd.s32 %s9, 1
    %s17 = ssub.s32 %s9, %s16
    %p18 = scmp.eq.s32.totalorder %s17, 0
    %s20 = sadd.s32 %s19, 1
    %s21 = scalar_select %p18, %s19, %s20
    %p24 = pneg %p18
    %p25 = scmp.eq.s32.totalorder %s9, 1
    %p26 = por %p24, %p25
    %p27 = scmp.ne.s32.totalorder %s19, %s22
    %p28 = scmp.eq.s32.totalorder %s9, 0
    %p29 = por %p27, %p28
    %p30 = scmp.ne.s32.totalorder %s19, %s22
    %p31 = scmp.eq.s32.totalorder %s14, 1
    %p32 = por %p30, %p31
    %p33 = scmp.ne.s32.totalorder %s22, %s23
    %p34 = scmp.eq.s32.totalorder %s14, 0
    %p35 = por %p33, %p34
    %p36 = scmp.ne.s32.totalorder %s22, %s23
    %p37 = scmp.eq.s32.totalorder %s15, 1
    %p38 = por %p36, %p37
    %p40 = scmp.ne.s32.totalorder %s23, %s39
    %p41 = scmp.eq.s32.totalorder %s15, 0
    %p42 = por %p40, %p41
    %s44 = sadd.s32 %s43, 1
    %p47 = scmp.eq.s32.totalorder %s9, 1
    %p48 = scmp.ne.s32.totalorder %s43, %s45
    %p49 = scmp.eq.s32.totalorder %s9, 0
    %p50 = por %p48, %p49
    %p51 = scmp.ne.s32.totalorder %s43, %s45
    %p52 = scmp.eq.s32.totalorder %s14, 1
    %p53 = por %p51, %p52
    %p54 = scmp.ne.s32.totalorder %s45, %s46
    %p55 = scmp.eq.s32.totalorder %s14, 0
    %p56 = por %p54, %p55
    %p57 = scmp.ne.s32.totalorder %s45, %s46
    %p58 = scmp.eq.s32.totalorder %s15, 1
    %p59 = por %p57, %p58
    %p61 = scmp.ne.s32.totalorder %s46, %s60
    %p62 = scmp.eq.s32.totalorder %s15, 0
    %p63 = por %p61, %p62
    %s65 = sadd.s32 %s64, 1
    %p68 = scmp.eq.s32.totalorder %s9, 1
    %p69 = scmp.ne.s32.totalorder %s64, %s66
    %p70 = scmp.eq.s32.totalorder %s9, 0
    %p71 = por %p69, %p70
    %p72 = scmp.ne.s32.totalorder %s64, %s66
    %p73 = scmp.eq.s32.totalorder %s14, 1
    %p74 = por %p72, %p73
    %p75 = scmp.ne.s32.totalorder %s66, %s67
    %p76 = scmp.eq.s32.totalorder %s14, 0
    %p77 = por %p75, %p76
    %p78 = scmp.ne.s32.totalorder %s66, %s67
    %p79 = scmp.eq.s32.totalorder %s15, 1
    %p80 = por %p78, %p79
    %p82 = scmp.ne.s32.totalorder %s67, %s81
    %p83 = scmp.eq.s32.totalorder %s15, 0
    %p84 = por %p82, %p83
    %s85 = ssub.s32 %s9, %s16
    %p86 = scmp.eq.s32.totalorder %s85, 0
    %s88 = sadd.s32 %s87, 1
    %s89 = scalar_select %p86, %s87, %s88
    %p92 = pneg %p86
    %p93 = scmp.eq.s32.totalorder %s9, 1
    %p94 = por %p92, %p93
    %p95 = scmp.ne.s32.totalorder %s87, %s90
    %p96 = scmp.eq.s32.totalorder %s9, 0
    %p97 = por %p95, %p96
    %p98 = scmp.ne.s32.totalorder %s87, %s90
    %p99 = scmp.eq.s32.totalorder %s14, 1
    %p100 = por %p98, %p99
    %p101 = scmp.ne.s32.totalorder %s90, %s91
    %p102 = scmp.eq.s32.totalorder %s14, 0
    %p103 = por %p101, %p102
    %p104 = scmp.ne.s32.totalorder %s90, %s91
    %p105 = scmp.eq.s32.totalorder %s15, 1
    %p106 = por %p104, %p105
    %p108 = scmp.ne.s32.totalorder %s91, %s107
    %p109 = scmp.eq.s32.totalorder %s15, 0
    %p110 = por %p108, %p109
    %p111 = scmp.le.s32.totalorder 1, %s9
    %p112 = scmp.lt.s32.totalorder %s9, 3
    %p113 = pnand %p111, %p112
    %p114 = pneg %p113
    // Predicated region
    $region9: #{convbnsilu_forward.1} parent=5 // pred_check
      _
    $region10: #{convbnsilu_forward.1} parent=5 // pred_check_branch
      %116 = sbr.rel (%p113) target = $region12
    $region11: #{convbnsilu_forward.1} parent=5 // pred_region
      %s117 = ssub.s32 %s9, 1
      // Predicated region
      $region13: #{convbnsilu_forward.1} parent=11 // pred_check
        %p118 = pneg %p56
      $region14: #{convbnsilu_forward.1} parent=11 // pred_check_branch
        %120 = sbr.rel (%p118) target = $region16
      $region15: #{convbnsilu_forward.1} parent=11 // pred_region
        _
      $region16: #{convbnsilu_forward.1} parent=11 // pred_fallthru
        _
      // Predicated region
      $region17: #{convbnsilu_forward.1} parent=11 // pred_check
        %p121 = pneg %p77
      $region18: #{convbnsilu_forward.1} parent=11 // pred_check_branch
        %123 = sbr.rel (%p121) target = $region20
      $region19: #{convbnsilu_forward.1} parent=11 // pred_region
        _
      $region20: #{convbnsilu_forward.1} parent=11 // pred_fallthru
        _
    $region12: #{convbnsilu_forward.1} parent=5 // pred_fallthru
      _
    %p124 = scmp.lt.s32.totalorder %s9, 2
    // Predicated region
    $region21: #{convbnsilu_forward.1} parent=5 // pred_check
      %p125 = pneg %p124
    $region22: #{convbnsilu_forward.1} parent=5 // pred_check_branch
      %127 = sbr.rel (%p125) target = $region24
    $region23: #{convbnsilu_forward.1} parent=5 // pred_region
      // Predicated region
      $region25: #{convbnsilu_forward.1} parent=23 // pred_check
        %p128 = pneg %p29
      $region26: #{convbnsilu_forward.1} parent=23 // pred_check_branch
        %130 = sbr.rel (%p128) target = $region28
      $region27: #{convbnsilu_forward.1} parent=23 // pred_region
        %s131 = smul.u32 32, %s9
        %p132 = scmp.lt.s32.totalorder %s131, 63
        %s133 = scalar_select %p132, %s131, 63
        %s134 = smul.addr %s133, 4
        %s135 = scalar_lea.vmem %s0, %s134
        %s136 = smul.u32 32, %s9
      $region28: #{convbnsilu_forward.1} parent=23 // pred_fallthru
        _
    $region24: #{convbnsilu_forward.1} parent=5 // pred_fallthru
      _
    %p137 = scmp.le.s32.totalorder 1, %s9
    %p138 = scmp.lt.s32.totalorder %s9, 3
    %p139 = pnand %p137, %p138
    %p140 = pneg %p139
    // Predicated region
    $region29: #{convbnsilu_forward.1} parent=5 // pred_check
      _
    $region30: #{convbnsilu_forward.1} parent=5 // pred_check_branch
      %142 = sbr.rel (%p139) target = $region32
    $region31: #{convbnsilu_forward.1} parent=5 // pred_region
      %s143 = ssub.s32 %s9, 1
      %s144 = smul.u32 32, %s14
      %p145 = scmp.lt.s32.totalorder %s144, 63
      %s146 = scalar_select %p145, %s144, 63
      %s147 = smul.addr %s146, 4
      %s148 = scalar_lea.vmem %s0, %s147
      %p149 = pneg %p35
      %p150 = pneg %p32
      %p151 = pneg %p56
      %p152 = pneg %p53
      %p153 = pneg %p77
      %p154 = pneg %p74
      %p155 = pneg %p103
      %p156 = pneg %p100
      %s157 = smul.u32 32, %s14
      %p158 = scmp.lt.s32.totalorder %s157, 63
      %s159 = scalar_select %p158, %s157, 63
      %s160 = smul.addr %s159, 8
      %s161 = scalar_lea.vmem %s3, %s160
      %s162 = smul.u32 32, %s14
      %p163 = scmp.lt.s32.totalorder %s162, 63
      %s164 = scalar_select %p163, %s162, 63
      %s165 = smul.addr %s164, 4
      %s166 = scalar_lea.vmem %s0, %s165
      %s167 = smul.u32 32, %s14
      %s168 = smul.u32 32, %s14
      %p169 = scmp.lt.s32.totalorder %s168, 63
      %s170 = scalar_select %p169, %s168, 63
      %s171 = smul.addr %s170, 8
      %s172 = scalar_lea.vmem %s3, %s171
      %s173 = smul.u32 32, %s14
      %v175 = vld [vmem:[%s166] sm:$0xf]
      %v176 = vld [vmem:[%s166 + $0x4] sm:$0xf]
      %v177 = vld [vmem:[%s166 + $0x8] sm:$0xf]
      %v178 = vld [vmem:[%s166 + $0xc] sm:$0xf]
      %v179 = vld [vmem:[%s166 + $0x10] sm:$0xf]
      %v180 = vld [vmem:[%s166 + $0x14] sm:$0xf]
      %v181 = vld [vmem:[%s166 + $0x18] sm:$0xf]
      %v182 = vld [vmem:[%s166 + $0x1c] sm:$0xf]
      %v183 = vld [vmem:[%s166 + $0x20] sm:$0xf]
      %v184 = vld [vmem:[%s166 + $0x24] sm:$0xf]
      %v185 = vld [vmem:[%s166 + $0x28] sm:$0xf]
      %v186 = vld [vmem:[%s166 + $0x2c] sm:$0xf]
      %v187 = vld [vmem:[%s166 + $0x30] sm:$0xf]
      %v188 = vld [vmem:[%s166 + $0x34] sm:$0xf]
      %v189 = vld [vmem:[%s166 + $0x38] sm:$0xf]
      %v190 = vld [vmem:[%s166 + $0x3c] sm:$0xf]
      %v191 = vld [vmem:[%s166 + $0x40] sm:$0xf]
      %v192 = vld [vmem:[%s166 + $0x44] sm:$0xf]
      %v193 = vld [vmem:[%s166 + $0x48] sm:$0xf]
      %v194 = vld [vmem:[%s166 + $0x4c] sm:$0xf]
      %v195 = vld [vmem:[%s166 + $0x50] sm:$0xf]
      %v196 = vld [vmem:[%s166 + $0x54] sm:$0xf]
      %v197 = vld [vmem:[%s166 + $0x58] sm:$0xf]
      %v198 = vld [vmem:[%s166 + $0x5c] sm:$0xf]
      %v199 = vld [vmem:[%s166 + $0x60] sm:$0xf]
      %v200 = vld [vmem:[%s166 + $0x64] sm:$0xf]
      %v201 = vld [vmem:[%s166 + $0x68] sm:$0xf]
      %v202 = vld [vmem:[%s166 + $0x6c] sm:$0xf]
      %v203 = vld [vmem:[%s166 + $0x70] sm:$0xf]
      %v204 = vld [vmem:[%s166 + $0x74] sm:$0xf]
      %v205 = vld [vmem:[%s166 + $0x78] sm:$0xf]
      %v206 = vld [vmem:[%s166 + $0x7c] sm:$0xf]
      %v207 = vld [vmem:[%s1] sm:$0xf]
      %v208 = vld [vmem:[%s1 + $0x4] sm:$0xf]
      %v209 = vld [vmem:[%s1 + $0x8] sm:$0xf]
      %v210 = vld [vmem:[%s1 + $0xc] sm:$0xf]
      %v211 = vld [vmem:[%s1 + $0x10] sm:$0x3]
      %v212 = vld [vmem:[%s2] sm:$0x1]
      %v214 = vlaneseq
      %v215 = vshrl.u32 %v214, 7
      %v216 = vsub.s32 0, %v215
      %v217 = vrot.slane %v212, %v216
      %v251 = vunpack.c.l.b16 %v175
      %v252 = vunpack.c.l.b16 %v176
      %v253 = vunpack.c.l.b16 %v177
      %v254 = vunpack.c.l.b16 %v178
      %v255 = vunpack.c.l.b16 %v179
      %v256 = vunpack.c.l.b16 %v180
      %v257 = vunpack.c.l.b16 %v181
      %v258 = vunpack.c.l.b16 %v182
      %v259 = vunpack.c.l.b16 %v183
      %v260 = vunpack.c.l.b16 %v184
      %v261 = vunpack.c.l.b16 %v185
      %v262 = vunpack.c.l.b16 %v186
      %v263 = vunpack.c.l.b16 %v187
      %v264 = vunpack.c.l.b16 %v188
      %v265 = vunpack.c.l.b16 %v189
      %v266 = vunpack.c.l.b16 %v190
      %v267 = vunpack.c.l.b16 %v191
      %v268 = vunpack.c.l.b16 %v192
      %v269 = vunpack.c.l.b16 %v193
      %v270 = vunpack.c.l.b16 %v194
      %v271 = vunpack.c.l.b16 %v195
      %v272 = vunpack.c.l.b16 %v196
      %v273 = vunpack.c.l.b16 %v197
      %v274 = vunpack.c.l.b16 %v198
      %v275 = vunpack.c.l.b16 %v199
      %v276 = vunpack.c.l.b16 %v200
      %v277 = vunpack.c.l.b16 %v201
      %v278 = vunpack.c.l.b16 %v202
      %v279 = vunpack.c.l.b16 %v203
      %v280 = vunpack.c.l.b16 %v204
      %v281 = vunpack.c.l.b16 %v205
      %v282 = vunpack.c.l.b16 %v206
      %v283 = vpack.c.b16 %v252, %v251
      %v284 = vpack.c.b16 %v254, %v253
      %v285 = vpack.c.b16 %v256, %v255
      %v286 = vpack.c.b16 %v258, %v257
      %v287 = vpack.c.b16 %v260, %v259
      %v288 = vpack.c.b16 %v262, %v261
      %v289 = vpack.c.b16 %v264, %v263
      %v290 = vpack.c.b16 %v266, %v265
      %v291 = vpack.c.b16 %v268, %v267
      %v292 = vpack.c.b16 %v270, %v269
      %v293 = vpack.c.b16 %v272, %v271
      %v294 = vpack.c.b16 %v274, %v273
      %v295 = vpack.c.b16 %v276, %v275
      %v296 = vpack.c.b16 %v278, %v277
      %v297 = vpack.c.b16 %v280, %v279
      %v298 = vpack.c.b16 %v282, %v281
      %v304 = vunpack.c.l.b16 %v207
      %v305 = vunpack.c.l.b16 %v208
      %v306 = vunpack.c.l.b16 %v209
      %v307 = vunpack.c.l.b16 %v210
      %v308 = vunpack.c.l.b16 %v211
      %v309 = vpack.c.b16 %v305, %v304
      %v310 = vpack.c.b16 %v307, %v306
      %v311 = vpack.c.b16 %v308, %v308
      %vm314 = vcmask 293888
      %v316 = vsel %vm314, %v283, 0
      %v319 = vsel %vm314, %v284, 0
      %v322 = vsel %vm314, %v285, 0
      %v325 = vsel %vm314, %v286, 0
      %v328 = vsel %vm314, %v287, 0
      %v331 = vsel %vm314, %v288, 0
      %v334 = vsel %vm314, %v289, 0
      %v337 = vsel %vm314, %v290, 0
      %v340 = vsel %vm314, %v291, 0
      %v343 = vsel %vm314, %v292, 0
      %v346 = vsel %vm314, %v293, 0
      %v349 = vsel %vm314, %v294, 0
      %v352 = vsel %vm314, %v295, 0
      %v355 = vsel %vm314, %v296, 0
      %v358 = vsel %vm314, %v297, 0
      %v361 = vsel %vm314, %v298, 0
      %vm363 = vcmask 1041408
      %v365 = vsel %vm363, %v311, 0
      %367 = vmatprep.subr.bf16.mxu0 0
      %368 = vmatpush1.bf16.msra.mxu0 %v309
      %369 = vmatprep.subr.bf16.mxu0 0
      %370 = vmatpush1.bf16.msra.mxu0 %v310
      %371 = vmatprep.subr.bf16.mxu0 0
      %372 = vmatpush1.bf16.msra.mxu0 %v365
      %373 = vmatprep.subr.bf16.mxu0 0
      %374 = vmatpush1.bf16.msra.mxu0 0
      %375 = vmatprep.subr.bf16.mxu0 0
      %376 = vmatpush1.bf16.msra.mxu0 0
      %377 = vmatprep.subr.bf16.mxu0 0
      %378 = vmatpush1.bf16.msra.mxu0 0
      %379 = vmatprep.subr.bf16.mxu0 0
      %380 = vmatpush1.bf16.msra.mxu0 0
      %381 = vmatprep.subr.bf16.mxu0 0
      %382 = vmatpush1.bf16.msra.mxu0 0
      %383 = vmatprep.subr.bf16.mxu0 0
      %384 = vmatpush1.bf16.msra.mxu0 0
      %385 = vmatprep.subr.bf16.mxu0 0
      %386 = vmatpush1.bf16.msra.mxu0 0
      %387 = vmatprep.subr.bf16.mxu0 0
      %388 = vmatpush1.bf16.msra.mxu0 0
      %389 = vmatprep.subr.bf16.mxu0 0
      %390 = vmatpush1.bf16.msra.mxu0 0
      %391 = vmatprep.subr.bf16.mxu0 0
      %392 = vmatpush1.bf16.msra.mxu0 0
      %393 = vmatprep.subr.bf16.mxu0 0
      %394 = vmatpush1.bf16.msra.mxu0 0
      %395 = vmatprep.subr.bf16.mxu0 0
      %396 = vmatpush1.bf16.msra.mxu0 0
      %397 = vmatprep.subr.bf16.mxu0 0
      %398 = vmatpush1.bf16.msra.mxu0 0
      %399 = vmatprep.mubr.bf16.mxu0 0
      %400 = vmatmul.mubr.bf16.gmra.mrb[0].mxu0 %v316
      %v401 = vpop.f32.mrb[0].mxu0
      %v402 = vadd.f32 %v217, %v401
      %v403 = vpop.f32.mrb[0].mxu0
      %v404 = vpop.f32.mrb[0].mxu0
      %v405 = vadd.f32 %v217, %v404
      %v406 = vpop.f32.mrb[0].mxu0
      %407 = vmatprep.mubr.bf16.mxu0 0
      %408 = vmatmul.mubr.bf16.gmra.mrb[0].mxu0 %v319
      %v409 = vpop.f32.mrb[0].mxu0
      %v410 = vadd.f32 %v217, %v409
      %v411 = vpop.f32.mrb[0].mxu0
      %v412 = vpop.f32.mrb[0].mxu0
      %v413 = vadd.f32 %v217, %v412
      %v414 = vpop.f32.mrb[0].mxu0
      %415 = vmatprep.mubr.bf16.mxu0 0
      %416 = vmatmul.mubr.bf16.gmra.mrb[0].mxu0 %v322
      %v417 = vpop.f32.mrb[0].mxu0
      %v418 = vadd.f32 %v217, %v417
      %v419 = vpop.f32.mrb[0].mxu0
      %v420 = vpop.f32.mrb[0].mxu0
      %v421 = vadd.f32 %v217, %v420
      %v422 = vpop.f32.mrb[0].mxu0
      %423 = vmatprep.mubr.bf16.mxu0 0
      %424 = vmatmul.mubr.bf16.gmra.mrb[0].mxu0 %v325
      %v425 = vpop.f32.mrb[0].mxu0
      %v426 = vadd.f32 %v217, %v425
      %v427 = vpop.f32.mrb[0].mxu0
      %v428 = vpop.f32.mrb[0].mxu0
      %v429 = vadd.f32 %v217, %v428
      %v430 = vpop.f32.mrb[0].mxu0
      %431 = vmatprep.mubr.bf16.mxu0 0
      %432 = vmatmul.mubr.bf16.gmra.mrb[0].mxu0 %v328
      %v433 = vpop.f32.mrb[0].mxu0
      %v434 = vadd.f32 %v217, %v433
      %v435 = vpop.f32.mrb[0].mxu0
      %v436 = vpop.f32.mrb[0].mxu0
      %v437 = vadd.f32 %v217, %v436
      %v438 = vpop.f32.mrb[0].mxu0
      %439 = vmatprep.mubr.bf16.mxu0 0
      %440 = vmatmul.mubr.bf16.gmra.mrb[0].mxu0 %v331
      %v441 = vpop.f32.mrb[0].mxu0
      %v442 = vadd.f32 %v217, %v441
      %v443 = vpop.f32.mrb[0].mxu0
      %v444 = vpop.f32.mrb[0].mxu0
      %v445 = vadd.f32 %v217, %v444
      %v446 = vpop.f32.mrb[0].mxu0
      %447 = vmatprep.mubr.bf16.mxu0 0
      %448 = vmatmul.mubr.bf16.gmra.mrb[0].mxu0 %v334
      %v449 = vpop.f32.mrb[0].mxu0
      %v450 = vadd.f32 %v217, %v449
      %v451 = vpop.f32.mrb[0].mxu0
      %v452 = vpop.f32.mrb[0].mxu0
      %v453 = vadd.f32 %v217, %v452
      %v454 = vpop.f32.mrb[0].mxu0
      %455 = vmatprep.mubr.bf16.mxu0 0
      %456 = vmatmul.mubr.bf16.gmra.mrb[0].mxu0 %v337
      %v457 = vpop.f32.mrb[0].mxu0
      %v458 = vadd.f32 %v217, %v457
      %v459 = vpop.f32.mrb[0].mxu0
      %v460 = vpop.f32.mrb[0].mxu0
      %v461 = vadd.f32 %v217, %v460
      %v462 = vpop.f32.mrb[0].mxu0
      %463 = vmatprep.mubr.bf16.mxu0 0
      %464 = vmatmul.mubr.bf16.gmra.mrb[0].mxu0 %v340
      %v465 = vpop.f32.mrb[0].mxu0
      %v466 = vadd.f32 %v217, %v465
      %v467 = vpop.f32.mrb[0].mxu0
      %v468 = vpop.f32.mrb[0].mxu0
      %v469 = vadd.f32 %v217, %v468
      %v470 = vpop.f32.mrb[0].mxu0
      %471 = vmatprep.mubr.bf16.mxu0 0
      %472 = vmatmul.mubr.bf16.gmra.mrb[0].mxu0 %v343
      %v473 = vpop.f32.mrb[0].mxu0
      %v474 = vadd.f32 %v217, %v473
      %v475 = vpop.f32.mrb[0].mxu0
      %v476 = vpop.f32.mrb[0].mxu0
      %v477 = vadd.f32 %v217, %v476
      %v478 = vpop.f32.mrb[0].mxu0
      %479 = vmatprep.mubr.bf16.mxu0 0
      %480 = vmatmul.mubr.bf16.gmra.mrb[0].mxu0 %v346
      %v481 = vpop.f32.mrb[0].mxu0
      %v482 = vadd.f32 %v217, %v481
      %v483 = vpop.f32.mrb[0].mxu0
      %v484 = vpop.f32.mrb[0].mxu0
      %v485 = vadd.f32 %v217, %v484
      %v486 = vpop.f32.mrb[0].mxu0
      %487 = vmatprep.mubr.bf16.mxu0 0
      %488 = vmatmul.mubr.bf16.gmra.mrb[0].mxu0 %v349
      %v489 = vpop.f32.mrb[0].mxu0
      %v490 = vadd.f32 %v217, %v489
      %v491 = vpop.f32.mrb[0].mxu0
      %v492 = vpop.f32.mrb[0].mxu0
      %v493 = vadd.f32 %v217, %v492
      %v494 = vpop.f32.mrb[0].mxu0
      %495 = vmatprep.mubr.bf16.mxu0 0
      %496 = vmatmul.mubr.bf16.gmra.mrb[0].mxu0 %v352
      %v497 = vpop.f32.mrb[0].mxu0
      %v498 = vadd.f32 %v217, %v497
      %v499 = vpop.f32.mrb[0].mxu0
      %v500 = vpop.f32.mrb[0].mxu0
      %v501 = vadd.f32 %v217, %v500
      %v502 = vpop.f32.mrb[0].mxu0
      %503 = vmatprep.mubr.bf16.mxu0 0
      %504 = vmatmul.mubr.bf16.gmra.mrb[0].mxu0 %v355
      %v505 = vpop.f32.mrb[0].mxu0
      %v506 = vadd.f32 %v217, %v505
      %v507 = vpop.f32.mrb[0].mxu0
      %v508 = vpop.f32.mrb[0].mxu0
      %v509 = vadd.f32 %v217, %v508
      %v510 = vpop.f32.mrb[0].mxu0
      %511 = vmatprep.mubr.bf16.mxu0 0
      %512 = vmatmul.mubr.bf16.gmra.mrb[0].mxu0 %v358
      %v513 = vpop.f32.mrb[0].mxu0
      %v514 = vadd.f32 %v217, %v513
      %v515 = vpop.f32.mrb[0].mxu0
      %v516 = vpop.f32.mrb[0].mxu0
      %v517 = vadd.f32 %v217, %v516
      %v518 = vpop.f32.mrb[0].mxu0
      %519 = vmatprep.mubr.bf16.mxu0 0
      %520 = vmatmul.mubr.bf16.gmra.mrb[0].mxu0 %v361
      %v521 = vpop.f32.mrb[0].mxu0
      %v522 = vadd.f32 %v217, %v521
      %v523 = vpop.f32.mrb[0].mxu0
      %v524 = vpop.f32.mrb[0].mxu0
      %v525 = vadd.f32 %v217, %v524
      %v526 = vpop.f32.mrb[0].mxu0
      %527 = vdwg.mxu0
      %v528 = vsub.f32 0.0, %v402
      %v529 = vsub.f32 0.0, %v405
      %v530 = vsub.f32 0.0, %v410
      %v531 = vsub.f32 0.0, %v413
      %v532 = vsub.f32 0.0, %v418
      %v533 = vsub.f32 0.0, %v421
      %v534 = vsub.f32 0.0, %v426
      %v535 = vsub.f32 0.0, %v429
      %v536 = vsub.f32 0.0, %v434
      %v537 = vsub.f32 0.0, %v437
      %v538 = vsub.f32 0.0, %v442
      %v539 = vsub.f32 0.0, %v445
      %v540 = vsub.f32 0.0, %v450
      %v541 = vsub.f32 0.0, %v453
      %v542 = vsub.f32 0.0, %v458
      %v543 = vsub.f32 0.0, %v461
      %v544 = vsub.f32 0.0, %v466
      %v545 = vsub.f32 0.0, %v469
      %v546 = vsub.f32 0.0, %v474
      %v547 = vsub.f32 0.0, %v477
      %v548 = vsub.f32 0.0, %v482
      %v549 = vsub.f32 0.0, %v485
      %v550 = vsub.f32 0.0, %v490
      %v551 = vsub.f32 0.0, %v493
      %v552 = vsub.f32 0.0, %v498
      %v553 = vsub.f32 0.0, %v501
      %v554 = vsub.f32 0.0, %v506
      %v555 = vsub.f32 0.0, %v509
      %v556 = vsub.f32 0.0, %v514
      %v557 = vsub.f32 0.0, %v517
      %v558 = vsub.f32 0.0, %v522
      %v559 = vsub.f32 0.0, %v525
      %v560 = vmul.f32 %v528, 1.442695
      %v561 = vpow.pop %v560
      %v562 = vmul.f32 %v529, 1.442695
      %v563 = vpow.pop %v562
      %v564 = vmul.f32 %v530, 1.442695
      %v565 = vpow.pop %v564
      %v566 = vmul.f32 %v531, 1.442695
      %v567 = vpow.pop %v566
      %v568 = vmul.f32 %v532, 1.442695
      %v569 = vpow.pop %v568
      %v570 = vmul.f32 %v533, 1.442695
      %v571 = vpow.pop %v570
      %v572 = vmul.f32 %v534, 1.442695
      %v573 = vpow.pop %v572
      %v574 = vmul.f32 %v535, 1.442695
      %v575 = vpow.pop %v574
      %v576 = vmul.f32 %v536, 1.442695
      %v577 = vpow.pop %v576
      %v578 = vmul.f32 %v537, 1.442695
      %v579 = vpow.pop %v578
      %v580 = vmul.f32 %v538, 1.442695
      %v581 = vpow.pop %v580
      %v582 = vmul.f32 %v539, 1.442695
      %v583 = vpow.pop %v582
      %v584 = vmul.f32 %v540, 1.442695
      %v585 = vpow.pop %v584
      %v586 = vmul.f32 %v541, 1.442695
      %v587 = vpow.pop %v586
      %v588 = vmul.f32 %v542, 1.442695
      %v589 = vpow.pop %v588
      %v590 = vmul.f32 %v543, 1.442695
      %v591 = vpow.pop %v590
      %v592 = vmul.f32 %v544, 1.442695
      %v593 = vpow.pop %v592
      %v594 = vmul.f32 %v545, 1.442695
      %v595 = vpow.pop %v594
      %v596 = vmul.f32 %v546, 1.442695
      %v597 = vpow.pop %v596
      %v598 = vmul.f32 %v547, 1.442695
      %v599 = vpow.pop %v598
      %v600 = vmul.f32 %v548, 1.442695
      %v601 = vpow.pop %v600
      %v602 = vmul.f32 %v549, 1.442695
      %v603 = vpow.pop %v602
      %v604 = vmul.f32 %v550, 1.442695
      %v605 = vpow.pop %v604
      %v606 = vmul.f32 %v551, 1.442695
      %v607 = vpow.pop %v606
      %v608 = vmul.f32 %v552, 1.442695
      %v609 = vpow.pop %v608
      %v610 = vmul.f32 %v553, 1.442695
      %v611 = vpow.pop %v610
      %v612 = vmul.f32 %v554, 1.442695
      %v613 = vpow.pop %v612
      %v614 = vmul.f32 %v555, 1.442695
      %v615 = vpow.pop %v614
      %v616 = vmul.f32 %v556, 1.442695
      %v617 = vpow.pop %v616
      %v618 = vmul.f32 %v557, 1.442695
      %v619 = vpow.pop %v618
      %v620 = vmul.f32 %v558, 1.442695
      %v621 = vpow.pop %v620
      %v622 = vmul.f32 %v559, 1.442695
      %v623 = vpow.pop %v622
      %v624 = vadd.f32 %v561, 1.0
      %v625 = vadd.f32 %v563, 1.0
      %v626 = vadd.f32 %v565, 1.0
      %v627 = vadd.f32 %v567, 1.0
      %v628 = vadd.f32 %v569, 1.0
      %v629 = vadd.f32 %v571, 1.0
      %v630 = vadd.f32 %v573, 1.0
      %v631 = vadd.f32 %v575, 1.0
      %v632 = vadd.f32 %v577, 1.0
      %v633 = vadd.f32 %v579, 1.0
      %v634 = vadd.f32 %v581, 1.0
      %v635 = vadd.f32 %v583, 1.0
      %v636 = vadd.f32 %v585, 1.0
      %v637 = vadd.f32 %v587, 1.0
      %v638 = vadd.f32 %v589, 1.0
      %v639 = vadd.f32 %v591, 1.0
      %v640 = vadd.f32 %v593, 1.0
      %v641 = vadd.f32 %v595, 1.0
      %v642 = vadd.f32 %v597, 1.0
      %v643 = vadd.f32 %v599, 1.0
      %v644 = vadd.f32 %v601, 1.0
      %v645 = vadd.f32 %v603, 1.0
      %v646 = vadd.f32 %v605, 1.0
      %v647 = vadd.f32 %v607, 1.0
      %v648 = vadd.f32 %v609, 1.0
      %v649 = vadd.f32 %v611, 1.0
      %v650 = vadd.f32 %v613, 1.0
      %v651 = vadd.f32 %v615, 1.0
      %v652 = vadd.f32 %v617, 1.0
      %v653 = vadd.f32 %v619, 1.0
      %v654 = vadd.f32 %v621, 1.0
      %v655 = vadd.f32 %v623, 1.0
      %v656 = vrcp.pop %v624
      %v657 = vrcp.pop %v625
      %v658 = vrcp.pop %v626
      %v659 = vrcp.pop %v627
      %v660 = vrcp.pop %v628
      %v661 = vrcp.pop %v629
      %v662 = vrcp.pop %v630
      %v663 = vrcp.pop %v631
      %v664 = vrcp.pop %v632
      %v665 = vrcp.pop %v633
      %v666 = vrcp.pop %v634
      %v667 = vrcp.pop %v635
      %v668 = vrcp.pop %v636
      %v669 = vrcp.pop %v637
      %v670 = vrcp.pop %v638
      %v671 = vrcp.pop %v639
      %v672 = vrcp.pop %v640
      %v673 = vrcp.pop %v641
      %v674 = vrcp.pop %v642
      %v675 = vrcp.pop %v643
      %v676 = vrcp.pop %v644
      %v677 = vrcp.pop %v645
      %v678 = vrcp.pop %v646
      %v679 = vrcp.pop %v647
      %v680 = vrcp.pop %v648
      %v681 = vrcp.pop %v649
      %v682 = vrcp.pop %v650
      %v683 = vrcp.pop %v651
      %v684 = vrcp.pop %v652
      %v685 = vrcp.pop %v653
      %v686 = vrcp.pop %v654
      %v687 = vrcp.pop %v655
      %v688 = vmul.f32 %v402, %v656
      %v689 = vmul.f32 %v405, %v657
      %v690 = vmul.f32 %v410, %v658
      %v691 = vmul.f32 %v413, %v659
      %v692 = vmul.f32 %v418, %v660
      %v693 = vmul.f32 %v421, %v661
      %v694 = vmul.f32 %v426, %v662
      %v695 = vmul.f32 %v429, %v663
      %v696 = vmul.f32 %v434, %v664
      %v697 = vmul.f32 %v437, %v665
      %v698 = vmul.f32 %v442, %v666
      %v699 = vmul.f32 %v445, %v667
      %v700 = vmul.f32 %v450, %v668
      %v701 = vmul.f32 %v453, %v669
      %v702 = vmul.f32 %v458, %v670
      %v703 = vmul.f32 %v461, %v671
      %v704 = vmul.f32 %v466, %v672
      %v705 = vmul.f32 %v469, %v673
      %v706 = vmul.f32 %v474, %v674
      %v707 = vmul.f32 %v477, %v675
      %v708 = vmul.f32 %v482, %v676
      %v709 = vmul.f32 %v485, %v677
      %v710 = vmul.f32 %v490, %v678
      %v711 = vmul.f32 %v493, %v679
      %v712 = vmul.f32 %v498, %v680
      %v713 = vmul.f32 %v501, %v681
      %v714 = vmul.f32 %v506, %v682
      %v715 = vmul.f32 %v509, %v683
      %v716 = vmul.f32 %v514, %v684
      %v717 = vmul.f32 %v517, %v685
      %v718 = vmul.f32 %v522, %v686
      %v719 = vmul.f32 %v525, %v687
      %720 = vst [vmem:[%s172] sm:$0xff] %v688
      %721 = vst [vmem:[%s172 + $0x8] sm:$0xff] %v689
      %722 = vst [vmem:[%s172 + $0x10] sm:$0xff] %v690
      %723 = vst [vmem:[%s172 + $0x18] sm:$0xff] %v691
      %724 = vst [vmem:[%s172 + $0x20] sm:$0xff] %v692
      %725 = vst [vmem:[%s172 + $0x28] sm:$0xff] %v693
      %726 = vst [vmem:[%s172 + $0x30] sm:$0xff] %v694
      %727 = vst [vmem:[%s172 + $0x38] sm:$0xff] %v695
      %728 = vst [vmem:[%s172 + $0x40] sm:$0xff] %v696
      %729 = vst [vmem:[%s172 + $0x48] sm:$0xff] %v697
      %730 = vst [vmem:[%s172 + $0x50] sm:$0xff] %v698
      %731 = vst [vmem:[%s172 + $0x58] sm:$0xff] %v699
      %732 = vst [vmem:[%s172 + $0x60] sm:$0xff] %v700
      %733 = vst [vmem:[%s172 + $0x68] sm:$0xff] %v701
      %734 = vst [vmem:[%s172 + $0x70] sm:$0xff] %v702
      %735 = vst [vmem:[%s172 + $0x78] sm:$0xff] %v703
      %736 = vst [vmem:[%s172 + $0x80] sm:$0xff] %v704
      %737 = vst [vmem:[%s172 + $0x88] sm:$0xff] %v705
      %738 = vst [vmem:[%s172 + $0x90] sm:$0xff] %v706
      %739 = vst [vmem:[%s172 + $0x98] sm:$0xff] %v707
      %740 = vst [vmem:[%s172 + $0xa0] sm:$0xff] %v708
      %741 = vst [vmem:[%s172 + $0xa8] sm:$0xff] %v709
      %742 = vst [vmem:[%s172 + $0xb0] sm:$0xff] %v710
      %743 = vst [vmem:[%s172 + $0xb8] sm:$0xff] %v711
      %744 = vst [vmem:[%s172 + $0xc0] sm:$0xff] %v712
      %745 = vst [vmem:[%s172 + $0xc8] sm:$0xff] %v713
      %746 = vst [vmem:[%s172 + $0xd0] sm:$0xff] %v714
      %747 = vst [vmem:[%s172 + $0xd8] sm:$0xff] %v715
      %748 = vst [vmem:[%s172 + $0xe0] sm:$0xff] %v716
      %749 = vst [vmem:[%s172 + $0xe8] sm:$0xff] %v717
      %750 = vst [vmem:[%s172 + $0xf0] sm:$0xff] %v718
      %751 = vst [vmem:[%s172 + $0xf8] sm:$0xff] %v719
      %s752 = smul.u32 32, %s14
      %p753 = scmp.lt.s32.totalorder %s752, 63
      %s754 = scalar_select %p753, %s752, 63
      %s755 = smul.addr %s754, 8
      %s756 = scalar_lea.vmem %s3, %s755
      // Predicated region
      $region33: #{convbnsilu_forward.1} parent=31 // pred_check
        %p757 = pneg %p100
      $region34: #{convbnsilu_forward.1} parent=31 // pred_check_branch
        %759 = sbr.rel (%p757) target = $region36
      $region35: #{convbnsilu_forward.1} parent=31 // pred_region
        %s760 = smul.u32 32, %s14
      $region36: #{convbnsilu_forward.1} parent=31 // pred_fallthru
        _
    $region32: #{convbnsilu_forward.1} parent=5 // pred_fallthru
      _
    %p761 = scmp.le.s32.totalorder 2, %s9
    // Predicated region
    $region37: #{convbnsilu_forward.1} parent=5 // pred_check
      %p762 = pneg %p761
    $region38: #{convbnsilu_forward.1} parent=5 // pred_check_branch
      %764 = sbr.rel (%p762) target = $region40
    $region39: #{convbnsilu_forward.1} parent=5 // pred_region
      %s765 = ssub.s32 %s9, 2
      // Predicated region
      $region41: #{convbnsilu_forward.1} parent=39 // pred_check
        %p766 = pneg %p106
      $region42: #{convbnsilu_forward.1} parent=39 // pred_check_branch
        %768 = sbr.rel (%p766) target = $region44
      $region43: #{convbnsilu_forward.1} parent=39 // pred_region
        %s769 = smul.u32 32, %s15
        %p770 = scmp.lt.s32.totalorder %s769, 63
        %s771 = scalar_select %p770, %s769, 63
        %s772 = smul.addr %s771, 8
        %s773 = scalar_lea.vmem %s3, %s772
      $region44: #{convbnsilu_forward.1} parent=39 // pred_fallthru
        _
    $region40: #{convbnsilu_forward.1} parent=5 // pred_fallthru
      _
  $region6: #{convbnsilu_forward.1} parent=0 // loop_footer
    %s13 = sadd.s32 1, %s9
  $region7: #{convbnsilu_forward.1} parent=0 // loop_footer_branch
    %8 = sbr.rel target = $region3
  $region8: #{convbnsilu_forward.1} parent=0 // loop_exit
    _

</llo_original>
